<compile_context>
chip_gen: v5e
topology: v5e:2x2
jax: 0.10.0
libtpu: 0.0.40
codegen_flags: <defaults>
</compile_context>

<pallas_src>
import jax
import jax.numpy as jnp
from jax.experimental import pallas as pl
from jax.experimental.pallas import tpu as pltpu

HIDDEN_SIZES = (512, 256, 128, 32)
LANE = 128
SUBLANE = 8
MAX_BATCH_TILE = 512


def _round_up(n, m):
    return ((n + m - 1) // m) * m


def dqn_kernel(x_ref,
               w1_ref, b1_ref,
               w2_ref, b2_ref,
               w3_ref, b3_ref,
               w4_ref, b4_ref,
               w5_ref, b5_ref,
               o_ref):
    """Entire 5-layer MLP fused: bf16 matmul inputs, f32 accumulation/ReLU."""
    h = x_ref[...]  # bf16 (TB, IN_pad)

    h = jnp.dot(h, w1_ref[...], preferred_element_type=jnp.float32) + b1_ref[...]
    h = jnp.maximum(h, 0.0).astype(jnp.bfloat16)

    h = jnp.dot(h, w2_ref[...], preferred_element_type=jnp.float32) + b2_ref[...]
    h = jnp.maximum(h, 0.0).astype(jnp.bfloat16)

    h = jnp.dot(h, w3_ref[...], preferred_element_type=jnp.float32) + b3_ref[...]
    h = jnp.maximum(h, 0.0).astype(jnp.bfloat16)

    h = jnp.dot(h, w4_ref[...], preferred_element_type=jnp.float32) + b4_ref[...]
    h = jnp.maximum(h, 0.0).astype(jnp.bfloat16)

    # Final layer: no activation (Q-values), f32 output.
    q = jnp.dot(h, w5_ref[...], preferred_element_type=jnp.float32) + b5_ref[...]
    o_ref[...] = q.astype(o_ref.dtype)


def init_dqn_params(key, state_size, action_size):
    """nn.Linear-style init U(-1/sqrt(fan_in), 1/sqrt(fan_in)) at TRUE sizes.

    Returns list of (W, b) with W shaped (in, out) f32, b shaped (1, out) f32.
    Padding to lane-dense shapes happens in dqn_forward.
    """
    sizes = [state_size, *HIDDEN_SIZES, action_size]
    params = []
    for i in range(len(sizes) - 1):
        fan_in, fan_out = sizes[i], sizes[i + 1]
        key, kw, kb = jax.random.split(key, 3)
        bound = 1.0 / (fan_in ** 0.5)
        w = jax.random.uniform(kw, (fan_in, fan_out), jnp.float32, -bound, bound)
        b = jax.random.uniform(kb, (1, fan_out), jnp.float32, -bound, bound)
        params.append((w, b))
    return params


def _pad_params(params):
    """Zero-pad every weight/bias to lane-dense (mult-of-128) feature dims.

    Weights -> bf16 (MXU inputs), biases stay f32 (added post-accumulation).
    Zero padding keeps the math exactly equivalent: padded input columns are
    zero, padded hidden units are ReLU(0)=0, and padded weight rows are zero.
    """
    padded = []
    for w, b in params:
        fi, fo = w.shape
        fi_p, fo_p = _round_up(fi, LANE), _round_up(fo, LANE)
        w_p = jnp.zeros((fi_p, fo_p), jnp.float32).at[:fi, :fo].set(w)
        b_p = jnp.zeros((1, fo_p), jnp.float32).at[:, :fo].set(b[0])
        padded.append((w_p.astype(jnp.bfloat16), b_p))
    return padded


def dqn_forward(x, params):
    """x: (batch, state_size) f32; params: list of (W:(in,out), b:(1,out)) f32."""
    batch, state_size = x.shape
    action_size = params[-1][0].shape[1]

    padded_params = _pad_params(params)
    in_pad = padded_params[0][0].shape[0]
    out_pad = padded_params[-1][0].shape[1]

    # Batch tiling: pad batch to a multiple of the tile (tile itself is a
    # multiple of 8 sublanes, capped at 512 rows so the fattest intermediate
    # (TB x 512 bf16 + f32 copy) stays well under 2 MB of VMEM).
    tb = min(MAX_BATCH_TILE, _round_up(max(batch, SUBLANE), SUBLANE))
    batch_pad = _round_up(batch, tb)
    grid = (batch_pad // tb,)

    # Lane-dense, zero-padded, bf16 activation input.
    x_p = jnp.zeros((batch_pad, in_pad), jnp.float32)
    x_p = x_p.at[:batch, :state_size].set(x).astype(jnp.bfloat16)

    flat_args = [x_p]
    in_specs = [pl.BlockSpec((tb, in_pad), lambda i: (i, 0))]
    for w, b in padded_params:
        flat_args.append(w)
        in_specs.append(pl.BlockSpec(w.shape, lambda i: (0, 0)))  # VMEM-resident
        flat_args.append(b)
        in_specs.append(pl.BlockSpec(b.shape, lambda i: (0, 0)))  # VMEM-resident

    # Advisory cost estimate (true, unpadded arithmetic).
    sizes = [state_size, *HIDDEN_SIZES, action_size]
    flops = 2 * batch * sum(sizes[i] * sizes[i + 1] for i in range(len(sizes) - 1))
    weight_bytes = sum(w.size * w.dtype.itemsize + b.size * b.dtype.itemsize
                       for w, b in padded_params)
    bytes_accessed = (x_p.size * x_p.dtype.itemsize
                      + weight_bytes
                      + batch_pad * out_pad * 4)
    cost = pl.CostEstimate(flops=flops, transcendentals=0,
                           bytes_accessed=bytes_accessed)

    out_padded = pl.pallas_call(
        dqn_kernel,
        out_shape=jax.ShapeDtypeStruct((batch_pad, out_pad), jnp.float32),
        grid=grid,
        in_specs=in_specs,
        out_specs=pl.BlockSpec((tb, out_pad), lambda i: (i, 0)),
        compiler_params=pltpu.CompilerParams(
            dimension_semantics=("parallel",)),
        cost_estimate=cost,
    )(*flat_args)

    # Slice the real batch rows / action columns back out.
    return out_padded[:batch, :action_size]


# Jit the whole forward so padding/cast/slice fuse with the pallas call.
dqn_forward_jit = jax.jit(dqn_forward)


def dqn_reference(x, params):
    """Pure-JAX f32 reference for correctness checking."""
    h = x
    for i, (w, b) in enumerate(params):
        h = h @ w + b
        if i < len(params) - 1:
            h = jnp.maximum(h, 0.0)
    return h


if __name__ == "__main__":
    key = jax.random.PRNGKey(0)
    batch, state_size, action_size = 2, 8, 4

    key, kx = jax.random.split(key)
    x = jax.random.normal(kx, (batch, state_size), jnp.float32)

    params = init_dqn_params(key, state_size, action_size)

    out = dqn_forward_jit(x, params)
    out = jax.block_until_ready(out)

    ref = dqn_reference(x, params)
    assert out.shape == (batch, action_size)
    # bf16 matmul inputs with f32 accumulation -> loose-ish tolerance.
    assert jnp.allclose(out, ref, atol=3e-2, rtol=3e-2), "mismatch vs reference"

    print("KERNEL_OK")
</pallas_src>

<mosaic_0001>
module attributes {stable_mosaic.version = 11 : i64} {
  func.func @dqn_kernel(%arg0: i32, %arg1: memref<8x128xbf16, #tpu.memory_space<vmem>>, %arg2: memref<128x512xbf16, #tpu.memory_space<vmem>>, %arg3: memref<1x512xf32, #tpu.memory_space<vmem>>, %arg4: memref<512x256xbf16, #tpu.memory_space<vmem>>, %arg5: memref<1x256xf32, #tpu.memory_space<vmem>>, %arg6: memref<256x128xbf16, #tpu.memory_space<vmem>>, %arg7: memref<1x128xf32, #tpu.memory_space<vmem>>, %arg8: memref<128x128xbf16, #tpu.memory_space<vmem>>, %arg9: memref<1x128xf32, #tpu.memory_space<vmem>>, %arg10: memref<128x128xbf16, #tpu.memory_space<vmem>>, %arg11: memref<1x128xf32, #tpu.memory_space<vmem>>, %arg12: memref<8x128xf32, #tpu.memory_space<vmem>>) attributes {dimension_semantics = [#tpu.dimension_semantics<parallel>], iteration_bounds = array<i64: 1>, scalar_prefetch = 0 : i64, scratch_operands = 0 : i64, tpu.core_type = #tpu.core_type<tc>, window_params = [{transform_indices = @transform_0, window_bounds = array<i64: 8, 128>}, {pipeline_mode = #tpu.pipeline_mode<synchronous>, transform_indices = @transform_1, window_bounds = array<i64: 128, 512>}, {pipeline_mode = #tpu.pipeline_mode<synchronous>, transform_indices = @transform_2, window_bounds = array<i64: 1, 512>}, {pipeline_mode = #tpu.pipeline_mode<synchronous>, transform_indices = @transform_3, window_bounds = array<i64: 512, 256>}, {pipeline_mode = #tpu.pipeline_mode<synchronous>, transform_indices = @transform_4, window_bounds = array<i64: 1, 256>}, {pipeline_mode = #tpu.pipeline_mode<synchronous>, transform_indices = @transform_5, window_bounds = array<i64: 256, 128>}, {pipeline_mode = #tpu.pipeline_mode<synchronous>, transform_indices = @transform_6, window_bounds = array<i64: 1, 128>}, {pipeline_mode = #tpu.pipeline_mode<synchronous>, transform_indices = @transform_7, window_bounds = array<i64: 128, 128>}, {pipeline_mode = #tpu.pipeline_mode<synchronous>, transform_indices = @transform_8, window_bounds = array<i64: 1, 128>}, {pipeline_mode = #tpu.pipeline_mode<synchronous>, transform_indices = @transform_9, window_bounds = array<i64: 128, 128>}, {pipeline_mode = #tpu.pipeline_mode<synchronous>, transform_indices = @transform_10, window_bounds = array<i64: 1, 128>}, {transform_indices = @transform_11, window_bounds = array<i64: 8, 128>}]} {
    %c0 = arith.constant 0 : index
    %c0_0 = arith.constant 0 : index
    %0 = vector.load %arg1[%c0, %c0_0] : memref<8x128xbf16, #tpu.memory_space<vmem>>, vector<8x128xbf16>
    %c0_1 = arith.constant 0 : index
    %c0_2 = arith.constant 0 : index
    %1 = vector.load %arg2[%c0_1, %c0_2] : memref<128x512xbf16, #tpu.memory_space<vmem>>, vector<128x512xbf16>
    %cst = arith.constant dense<0.000000e+00> : vector<8x512xf32>
    %2 = tpu.matmul %0, %1, %cst {dimension_numbers = #tpu.dot_dimension_numbers<[1], [0], [0], [1], [0, 0, 1, 1], [], []>} : vector<8x128xbf16>, vector<128x512xbf16>, vector<8x512xf32> -> vector<8x512xf32>
    %c0_3 = arith.constant 0 : index
    %c0_4 = arith.constant 0 : index
    %3 = vector.load %arg3[%c0_3, %c0_4] : memref<1x512xf32, #tpu.memory_space<vmem>>, vector<1x512xf32>
    %4 = vector.broadcast %3 : vector<1x512xf32> to vector<8x512xf32>
    %5 = arith.addf %2, %4 : vector<8x512xf32>
    %cst_5 = arith.constant 0.000000e+00 : f32
    %6 = vector.broadcast %cst_5 : f32 to vector<8x512xf32>
    %7 = arith.maximumf %5, %6 : vector<8x512xf32>
    %8 = arith.truncf %7 : vector<8x512xf32> to vector<8x512xbf16>
    %c0_6 = arith.constant 0 : index
    %c0_7 = arith.constant 0 : index
    %9 = vector.load %arg4[%c0_6, %c0_7] : memref<512x256xbf16, #tpu.memory_space<vmem>>, vector<512x256xbf16>
    %cst_8 = arith.constant dense<0.000000e+00> : vector<8x256xf32>
    %10 = tpu.matmul %8, %9, %cst_8 {dimension_numbers = #tpu.dot_dimension_numbers<[1], [0], [0], [1], [0, 0, 1, 1], [], []>} : vector<8x512xbf16>, vector<512x256xbf16>, vector<8x256xf32> -> vector<8x256xf32>
    %c0_9 = arith.constant 0 : index
    %c0_10 = arith.constant 0 : index
    %11 = vector.load %arg5[%c0_9, %c0_10] : memref<1x256xf32, #tpu.memory_space<vmem>>, vector<1x256xf32>
    %12 = vector.broadcast %11 : vector<1x256xf32> to vector<8x256xf32>
    %13 = arith.addf %10, %12 : vector<8x256xf32>
    %cst_11 = arith.constant 0.000000e+00 : f32
    %14 = vector.broadcast %cst_11 : f32 to vector<8x256xf32>
    %15 = arith.maximumf %13, %14 : vector<8x256xf32>
    %16 = arith.truncf %15 : vector<8x256xf32> to vector<8x256xbf16>
    %c0_12 = arith.constant 0 : index
    %c0_13 = arith.constant 0 : index
    %17 = vector.load %arg6[%c0_12, %c0_13] : memref<256x128xbf16, #tpu.memory_space<vmem>>, vector<256x128xbf16>
    %cst_14 = arith.constant dense<0.000000e+00> : vector<8x128xf32>
    %18 = tpu.matmul %16, %17, %cst_14 {dimension_numbers = #tpu.dot_dimension_numbers<[1], [0], [0], [1], [0, 0, 1, 1], [], []>} : vector<8x256xbf16>, vector<256x128xbf16>, vector<8x128xf32> -> vector<8x128xf32>
    %c0_15 = arith.constant 0 : index
    %c0_16 = arith.constant 0 : index
    %19 = vector.load %arg7[%c0_15, %c0_16] : memref<1x128xf32, #tpu.memory_space<vmem>>, vector<1x128xf32>
    %20 = vector.broadcast %19 : vector<1x128xf32> to vector<8x128xf32>
    %21 = arith.addf %18, %20 : vector<8x128xf32>
    %cst_17 = arith.constant 0.000000e+00 : f32
    %22 = vector.broadcast %cst_17 : f32 to vector<8x128xf32>
    %23 = arith.maximumf %21, %22 : vector<8x128xf32>
    %24 = arith.truncf %23 : vector<8x128xf32> to vector<8x128xbf16>
    %c0_18 = arith.constant 0 : index
    %c0_19 = arith.constant 0 : index
    %25 = vector.load %arg8[%c0_18, %c0_19] : memref<128x128xbf16, #tpu.memory_space<vmem>>, vector<128x128xbf16>
    %cst_20 = arith.constant dense<0.000000e+00> : vector<8x128xf32>
    %26 = tpu.matmul %24, %25, %cst_20 {dimension_numbers = #tpu.dot_dimension_numbers<[1], [0], [0], [1], [0, 0, 1, 1], [], []>} : vector<8x128xbf16>, vector<128x128xbf16>, vector<8x128xf32> -> vector<8x128xf32>
    %c0_21 = arith.constant 0 : index
    %c0_22 = arith.constant 0 : index
    %27 = vector.load %arg9[%c0_21, %c0_22] : memref<1x128xf32, #tpu.memory_space<vmem>>, vector<1x128xf32>
    %28 = vector.broadcast %27 : vector<1x128xf32> to vector<8x128xf32>
    %29 = arith.addf %26, %28 : vector<8x128xf32>
    %cst_23 = arith.constant 0.000000e+00 : f32
    %30 = vector.broadcast %cst_23 : f32 to vector<8x128xf32>
    %31 = arith.maximumf %29, %30 : vector<8x128xf32>
    %32 = arith.truncf %31 : vector<8x128xf32> to vector<8x128xbf16>
    %c0_24 = arith.constant 0 : index
    %c0_25 = arith.constant 0 : index
    %33 = vector.load %arg10[%c0_24, %c0_25] : memref<128x128xbf16, #tpu.memory_space<vmem>>, vector<128x128xbf16>
    %cst_26 = arith.constant dense<0.000000e+00> : vector<8x128xf32>
    %34 = tpu.matmul %32, %33, %cst_26 {dimension_numbers = #tpu.dot_dimension_numbers<[1], [0], [0], [1], [0, 0, 1, 1], [], []>} : vector<8x128xbf16>, vector<128x128xbf16>, vector<8x128xf32> -> vector<8x128xf32>
    %c0_27 = arith.constant 0 : index
    %c0_28 = arith.constant 0 : index
    %35 = vector.load %arg11[%c0_27, %c0_28] : memref<1x128xf32, #tpu.memory_space<vmem>>, vector<1x128xf32>
    %36 = vector.broadcast %35 : vector<1x128xf32> to vector<8x128xf32>
    %37 = arith.addf %34, %36 : vector<8x128xf32>
    %c0_29 = arith.constant 0 : index
    %c0_30 = arith.constant 0 : index
    %38 = vector.load %arg12[%c0_29, %c0_30] : memref<8x128xf32, #tpu.memory_space<vmem>>, vector<8x128xf32>
    tpu.vector_store %arg12[%c0_29, %c0_30], %37 {strides = array<i32>} : memref<8x128xf32, #tpu.memory_space<vmem>>, vector<8x128xf32>,
    return
  }
  func.func @transform_0(%arg0: i32) -> (i32, i32) {
    %c0_i32 = arith.constant 0 : i32
    %c0_i32_0 = arith.constant 0 : i32
    return %arg0, %c0_i32 : i32, i32
  }
  func.func @transform_1(%arg0: i32) -> (i32, i32) {
    %c0_i32 = arith.constant 0 : i32
    %c0_i32_0 = arith.constant 0 : i32
    %c0_i32_1 = arith.constant 0 : i32
    return %c0_i32, %c0_i32_0 : i32, i32
  }
  func.func @transform_2(%arg0: i32) -> (i32, i32) {
    %c0_i32 = arith.constant 0 : i32
    %c0_i32_0 = arith.constant 0 : i32
    %c0_i32_1 = arith.constant 0 : i32
    return %c0_i32, %c0_i32_0 : i32, i32
  }
  func.func @transform_3(%arg0: i32) -> (i32, i32) {
    %c0_i32 = arith.constant 0 : i32
    %c0_i32_0 = arith.constant 0 : i32
    %c0_i32_1 = arith.constant 0 : i32
    return %c0_i32, %c0_i32_0 : i32, i32
  }
  func.func @transform_4(%arg0: i32) -> (i32, i32) {
    %c0_i32 = arith.constant 0 : i32
    %c0_i32_0 = arith.constant 0 : i32
    %c0_i32_1 = arith.constant 0 : i32
    return %c0_i32, %c0_i32_0 : i32, i32
  }
  func.func @transform_5(%arg0: i32) -> (i32, i32) {
    %c0_i32 = arith.constant 0 : i32
    %c0_i32_0 = arith.constant 0 : i32
    %c0_i32_1 = arith.constant 0 : i32
    return %c0_i32, %c0_i32_0 : i32, i32
  }
  func.func @transform_6(%arg0: i32) -> (i32, i32) {
    %c0_i32 = arith.constant 0 : i32
    %c0_i32_0 = arith.constant 0 : i32
    %c0_i32_1 = arith.constant 0 : i32
    return %c0_i32, %c0_i32_0 : i32, i32
  }
  func.func @transform_7(%arg0: i32) -> (i32, i32) {
    %c0_i32 = arith.constant 0 : i32
    %c0_i32_0 = arith.constant 0 : i32
    %c0_i32_1 = arith.constant 0 : i32
    return %c0_i32, %c0_i32_0 : i32, i32
  }
  func.func @transform_8(%arg0: i32) -> (i32, i32) {
    %c0_i32 = arith.constant 0 : i32
    %c0_i32_0 = arith.constant 0 : i32
    %c0_i32_1 = arith.constant 0 : i32
    return %c0_i32, %c0_i32_0 : i32, i32
  }
  func.func @transform_9(%arg0: i32) -> (i32, i32) {
    %c0_i32 = arith.constant 0 : i32
    %c0_i32_0 = arith.constant 0 : i32
    %c0_i32_1 = arith.constant 0 : i32
    return %c0_i32, %c0_i32_0 : i32, i32
  }
  func.func @transform_10(%arg0: i32) -> (i32, i32) {
    %c0_i32 = arith.constant 0 : i32
    %c0_i32_0 = arith.constant 0 : i32
    %c0_i32_1 = arith.constant 0 : i32
    return %c0_i32, %c0_i32_0 : i32, i32
  }
  func.func @transform_11(%arg0: i32) -> (i32, i32) {
    %c0_i32 = arith.constant 0 : i32
    %c0_i32_0 = arith.constant 0 : i32
    return %arg0, %c0_i32 : i32, i32
  }
}

</mosaic_0001>

<llo_original>
// kernel: dqn_forward.1
$region0: #{dqn_forward.1}
  #allocation0 [shape = 'u32[]', space=smem, size = 0x4, offset = 0x4, fixed_abs, tag = 'smem constant byte address 0x4 - core index']
  #allocation1 [shape = 'u32[72,128]{1,0:T(1,128)}', space=vmem, size = 0x9000, scoped, tag = 'internal scratch']
  %s0 = inlined_call_operand.vmem [shape: bf16[8,128], index: 0, kind: input, shape index: {}]
  %s1 = inlined_call_operand.vmem [shape: bf16[128,512], index: 1, kind: input, shape index: {}]
  %s2 = inlined_call_operand.vmem [shape: f32[1,512], index: 2, kind: input, shape index: {}]
  %s3 = inlined_call_operand.vmem [shape: bf16[512,256], index: 3, kind: input, shape index: {}]
  %s4 = inlined_call_operand.vmem [shape: f32[1,256], index: 4, kind: input, shape index: {}]
  %s5 = inlined_call_operand.vmem [shape: bf16[256,128], index: 5, kind: input, shape index: {}]
  %s6 = inlined_call_operand.vmem [shape: f32[1,128], index: 6, kind: input, shape index: {}]
  %s7 = inlined_call_operand.vmem [shape: bf16[128,128], index: 7, kind: input, shape index: {}]
  %s8 = inlined_call_operand.vmem [shape: f32[1,128], index: 8, kind: input, shape index: {}]
  %s9 = inlined_call_operand.vmem [shape: bf16[128,128], index: 9, kind: input, shape index: {}]
  %s10 = inlined_call_operand.vmem [shape: f32[1,128], index: 10, kind: input, shape index: {}]
  %s11 = inlined_call_operand.vmem [shape: f32[8,128], index: 11, kind: output, shape index: {}]
  %s12 = sld [smem:[#allocation0]]
  $region54: #{dqn_forward.1} parent=0
    _
  %s14 = ssub.s32 1, %s12
  %s15 = scalar_select 0, %s14, %s12
  // Predicated region
  $region2: #{dqn_forward.1} parent=0 // pred_check
    _
  $region3: #{dqn_forward.1} parent=0 // pred_check_branch
    %17 = sbr.rel (0) target = $region5
  $region4: #{dqn_forward.1} parent=0 // pred_region
    _
  $region5: #{dqn_forward.1} parent=0 // pred_fallthru
    _
  // Predicated region
  $region6: #{dqn_forward.1} parent=0 // pred_check
    _
  $region7: #{dqn_forward.1} parent=0 // pred_check_branch
    %19 = sbr.rel (0) target = $region9
  $region8: #{dqn_forward.1} parent=0 // pred_region
    _
  $region9: #{dqn_forward.1} parent=0 // pred_fallthru
    _
  // Predicated region
  $region10: #{dqn_forward.1} parent=0 // pred_check
    _
  $region11: #{dqn_forward.1} parent=0 // pred_check_branch
    %21 = sbr.rel (0) target = $region13
  $region12: #{dqn_forward.1} parent=0 // pred_region
    _
  $region13: #{dqn_forward.1} parent=0 // pred_fallthru
    _
  // Predicated region
  $region14: #{dqn_forward.1} parent=0 // pred_check
    _
  $region15: #{dqn_forward.1} parent=0 // pred_check_branch
    %23 = sbr.rel (0) target = $region17
  $region16: #{dqn_forward.1} parent=0 // pred_region
    _
  $region17: #{dqn_forward.1} parent=0 // pred_fallthru
    _
  // Predicated region
  $region18: #{dqn_forward.1} parent=0 // pred_check
    _
  $region19: #{dqn_forward.1} parent=0 // pred_check_branch
    %25 = sbr.rel (0) target = $region21
  $region20: #{dqn_forward.1} parent=0 // pred_region
    _
  $region21: #{dqn_forward.1} parent=0 // pred_fallthru
    _
  // Predicated region
  $region22: #{dqn_forward.1} parent=0 // pred_check
    _
  $region23: #{dqn_forward.1} parent=0 // pred_check_branch
    %27 = sbr.rel (0) target = $region25
  $region24: #{dqn_forward.1} parent=0 // pred_region
    _
  $region25: #{dqn_forward.1} parent=0 // pred_fallthru
    _
  // Predicated region
  $region26: #{dqn_forward.1} parent=0 // pred_check
    _
  $region27: #{dqn_forward.1} parent=0 // pred_check_branch
    %29 = sbr.rel (0) target = $region29
  $region28: #{dqn_forward.1} parent=0 // pred_region
    _
  $region29: #{dqn_forward.1} parent=0 // pred_fallthru
    _
  // Predicated region
  $region30: #{dqn_forward.1} parent=0 // pred_check
    _
  $region31: #{dqn_forward.1} parent=0 // pred_check_branch
    %31 = sbr.rel (0) target = $region33
  $region32: #{dqn_forward.1} parent=0 // pred_region
    _
  $region33: #{dqn_forward.1} parent=0 // pred_fallthru
    _
  // Predicated region
  $region34: #{dqn_forward.1} parent=0 // pred_check
    _
  $region35: #{dqn_forward.1} parent=0 // pred_check_branch
    %33 = sbr.rel (0) target = $region37
  $region36: #{dqn_forward.1} parent=0 // pred_region
    _
  $region37: #{dqn_forward.1} parent=0 // pred_fallthru
    _
  // Predicated region
  $region38: #{dqn_forward.1} parent=0 // pred_check
    _
  $region39: #{dqn_forward.1} parent=0 // pred_check_branch
    %35 = sbr.rel (0) target = $region41
  $region40: #{dqn_forward.1} parent=0 // pred_region
    _
  $region41: #{dqn_forward.1} parent=0 // pred_fallthru
    _
  // Predicated region
  $region42: #{dqn_forward.1} parent=0 // pred_check
    _
  $region43: #{dqn_forward.1} parent=0 // pred_check_branch
    %37 = sbr.rel (0) target = $region45
  $region44: #{dqn_forward.1} parent=0 // pred_region
    _
  $region45: #{dqn_forward.1} parent=0 // pred_fallthru
    _
  %v38 = vld [vmem:[%s0] sm:$0xf]
  %v39 = vld [vmem:[%s1] sm:$0xff]
  %v40 = vld [vmem:[%s1 + $0x8] sm:$0xff]
  %v41 = vld [vmem:[%s1 + $0x10] sm:$0xff]
  %v42 = vld [vmem:[%s1 + $0x18] sm:$0xff]
  %v43 = vld [vmem:[%s1 + $0x20] sm:$0xff]
  %v44 = vld [vmem:[%s1 + $0x28] sm:$0xff]
  %v45 = vld [vmem:[%s1 + $0x30] sm:$0xff]
  %v46 = vld [vmem:[%s1 + $0x38] sm:$0xff]
  %v47 = vld [vmem:[%s1 + $0x40] sm:$0xff]
  %v48 = vld [vmem:[%s1 + $0x48] sm:$0xff]
  %v49 = vld [vmem:[%s1 + $0x50] sm:$0xff]
  %v50 = vld [vmem:[%s1 + $0x58] sm:$0xff]
  %v51 = vld [vmem:[%s1 + $0x60] sm:$0xff]
  %v52 = vld [vmem:[%s1 + $0x68] sm:$0xff]
  %v53 = vld [vmem:[%s1 + $0x70] sm:$0xff]
  %v54 = vld [vmem:[%s1 + $0x78] sm:$0xff]
  %v55 = vld [vmem:[%s1 + $0x80] sm:$0xff]
  %v56 = vld [vmem:[%s1 + $0x88] sm:$0xff]
  %v57 = vld [vmem:[%s1 + $0x90] sm:$0xff]
  %v58 = vld [vmem:[%s1 + $0x98] sm:$0xff]
  %v59 = vld [vmem:[%s1 + $0xa0] sm:$0xff]
  %v60 = vld [vmem:[%s1 + $0xa8] sm:$0xff]
  %v61 = vld [vmem:[%s1 + $0xb0] sm:$0xff]
  %v62 = vld [vmem:[%s1 + $0xb8] sm:$0xff]
  %v63 = vld [vmem:[%s1 + $0xc0] sm:$0xff]
  %v64 = vld [vmem:[%s1 + $0xc8] sm:$0xff]
  %v65 = vld [vmem:[%s1 + $0xd0] sm:$0xff]
  %v66 = vld [vmem:[%s1 + $0xd8] sm:$0xff]
  %v67 = vld [vmem:[%s1 + $0xe0] sm:$0xff]
  %v68 = vld [vmem:[%s1 + $0xe8] sm:$0xff]
  %v69 = vld [vmem:[%s1 + $0xf0] sm:$0xff]
  %v70 = vld [vmem:[%s1 + $0xf8] sm:$0xff]
  %v71 = vld [vmem:[%s2] sm:$0xf]
  %v73 = vperm.slane %v71, 0
  %v74 = vperm.slane %v71, 1
  %v75 = vperm.slane %v71, 2
  %v76 = vperm.slane %v71, 3
  %v113 = vunpack.c.l.b16 %v39
  %v114 = vunpack.c.h.b16 %v39
  %v115 = vunpack.c.l.b16 %v40
  %v116 = vunpack.c.h.b16 %v40
  %v117 = vunpack.c.l.b16 %v41
  %v118 = vunpack.c.h.b16 %v41
  %v119 = vunpack.c.l.b16 %v42
  %v120 = vunpack.c.h.b16 %v42
  %v121 = vunpack.c.l.b16 %v43
  %v122 = vunpack.c.h.b16 %v43
  %v123 = vunpack.c.l.b16 %v44
  %v124 = vunpack.c.h.b16 %v44
  %v125 = vunpack.c.l.b16 %v45
  %v126 = vunpack.c.h.b16 %v45
  %v127 = vunpack.c.l.b16 %v46
  %v128 = vunpack.c.h.b16 %v46
  %v129 = vunpack.c.l.b16 %v47
  %v130 = vunpack.c.h.b16 %v47
  %v131 = vunpack.c.l.b16 %v48
  %v132 = vunpack.c.h.b16 %v48
  %v133 = vunpack.c.l.b16 %v49
  %v134 = vunpack.c.h.b16 %v49
  %v135 = vunpack.c.l.b16 %v50
  %v136 = vunpack.c.h.b16 %v50
  %v137 = vunpack.c.l.b16 %v51
  %v138 = vunpack.c.h.b16 %v51
  %v139 = vunpack.c.l.b16 %v52
  %v140 = vunpack.c.h.b16 %v52
  %v141 = vunpack.c.l.b16 %v53
  %v142 = vunpack.c.h.b16 %v53
  %v143 = vunpack.c.l.b16 %v54
  %v144 = vunpack.c.h.b16 %v54
  %v145 = vunpack.c.l.b16 %v55
  %v146 = vunpack.c.h.b16 %v55
  %v147 = vunpack.c.l.b16 %v56
  %v148 = vunpack.c.h.b16 %v56
  %v149 = vunpack.c.l.b16 %v57
  %v150 = vunpack.c.h.b16 %v57
  %v151 = vunpack.c.l.b16 %v58
  %v152 = vunpack.c.h.b16 %v58
  %v153 = vunpack.c.l.b16 %v59
  %v154 = vunpack.c.h.b16 %v59
  %v155 = vunpack.c.l.b16 %v60
  %v156 = vunpack.c.h.b16 %v60
  %v157 = vunpack.c.l.b16 %v61
  %v158 = vunpack.c.h.b16 %v61
  %v159 = vunpack.c.l.b16 %v62
  %v160 = vunpack.c.h.b16 %v62
  %v161 = vunpack.c.l.b16 %v63
  %v162 = vunpack.c.h.b16 %v63
  %v163 = vunpack.c.l.b16 %v64
  %v164 = vunpack.c.h.b16 %v64
  %v165 = vunpack.c.l.b16 %v65
  %v166 = vunpack.c.h.b16 %v65
  %v167 = vunpack.c.l.b16 %v66
  %v168 = vunpack.c.h.b16 %v66
  %v169 = vunpack.c.l.b16 %v67
  %v170 = vunpack.c.h.b16 %v67
  %v171 = vunpack.c.l.b16 %v68
  %v172 = vunpack.c.h.b16 %v68
  %v173 = vunpack.c.l.b16 %v69
  %v174 = vunpack.c.h.b16 %v69
  %v175 = vunpack.c.l.b16 %v70
  %v176 = vunpack.c.h.b16 %v70
  %v177 = vpack.c.b16 %v117, %v113
  %v178 = vpack.c.b16 %v118, %v114
  %v179 = vpack.c.b16 %v119, %v115
  %v180 = vpack.c.b16 %v120, %v116
  %v181 = vpack.c.b16 %v125, %v121
  %v182 = vpack.c.b16 %v126, %v122
  %v183 = vpack.c.b16 %v127, %v123
  %v184 = vpack.c.b16 %v128, %v124
  %v185 = vpack.c.b16 %v133, %v129
  %v186 = vpack.c.b16 %v134, %v130
  %v187 = vpack.c.b16 %v135, %v131
  %v188 = vpack.c.b16 %v136, %v132
  %v189 = vpack.c.b16 %v141, %v137
  %v190 = vpack.c.b16 %v142, %v138
  %v191 = vpack.c.b16 %v143, %v139
  %v192 = vpack.c.b16 %v144, %v140
  %v193 = vpack.c.b16 %v149, %v145
  %v194 = vpack.c.b16 %v150, %v146
  %v195 = vpack.c.b16 %v151, %v147
  %v196 = vpack.c.b16 %v152, %v148
  %v197 = vpack.c.b16 %v157, %v153
  %v198 = vpack.c.b16 %v158, %v154
  %v199 = vpack.c.b16 %v159, %v155
  %v200 = vpack.c.b16 %v160, %v156
  %v201 = vpack.c.b16 %v165, %v161
  %v202 = vpack.c.b16 %v166, %v162
  %v203 = vpack.c.b16 %v167, %v163
  %v204 = vpack.c.b16 %v168, %v164
  %v205 = vpack.c.b16 %v173, %v169
  %v206 = vpack.c.b16 %v174, %v170
  %v207 = vpack.c.b16 %v175, %v171
  %v208 = vpack.c.b16 %v176, %v172
  %241 = vmatpush.bf16.msra.mxu0 %v205
  %242 = vmatpush.bf16.msra.mxu0 %v201
  %243 = vmatpush.bf16.msra.mxu0 %v197
  %244 = vmatpush.bf16.msra.mxu0 %v193
  %245 = vmatpush.bf16.msra.mxu0 %v189
  %246 = vmatpush.bf16.msra.mxu0 %v185
  %247 = vmatpush.bf16.msra.mxu0 %v181
  %248 = vmatpush.bf16.msra.mxu0 %v177
  %249 = vmatmul.bf16.gmra.mxu0 %v38
  %v250 = vpop.f32.mrf.mxu0
  %v251 = vadd.f32 %v73, %v250
  %v252 = vpop.f32.mrf.mxu0
  %253 = vdwg.mxu0
  %254 = vmatpush.bf16.msra.mxu0 %v206
  %255 = vmatpush.bf16.msra.mxu0 %v202
  %256 = vmatpush.bf16.msra.mxu0 %v198
  %257 = vmatpush.bf16.msra.mxu0 %v194
  %258 = vmatpush.bf16.msra.mxu0 %v190
  %259 = vmatpush.bf16.msra.mxu0 %v186
  %260 = vmatpush.bf16.msra.mxu0 %v182
  %261 = vmatpush.bf16.msra.mxu0 %v178
  %262 = vmatmul.bf16.gmra.mxu0 %v38
  %v263 = vpop.f32.mrf.mxu0
  %v264 = vadd.f32 %v74, %v263
  %v265 = vpop.f32.mrf.mxu0
  %266 = vdwg.mxu0
  %267 = vmatpush.bf16.msra.mxu0 %v207
  %268 = vmatpush.bf16.msra.mxu0 %v203
  %269 = vmatpush.bf16.msra.mxu0 %v199
  %270 = vmatpush.bf16.msra.mxu0 %v195
  %271 = vmatpush.bf16.msra.mxu0 %v191
  %272 = vmatpush.bf16.msra.mxu0 %v187
  %273 = vmatpush.bf16.msra.mxu0 %v183
  %274 = vmatpush.bf16.msra.mxu0 %v179
  %275 = vmatmul.bf16.gmra.mxu0 %v38
  %v276 = vpop.f32.mrf.mxu0
  %v277 = vadd.f32 %v75, %v276
  %v278 = vpop.f32.mrf.mxu0
  %279 = vdwg.mxu0
  %280 = vmatpush.bf16.msra.mxu0 %v208
  %281 = vmatpush.bf16.msra.mxu0 %v204
  %282 = vmatpush.bf16.msra.mxu0 %v200
  %283 = vmatpush.bf16.msra.mxu0 %v196
  %284 = vmatpush.bf16.msra.mxu0 %v192
  %285 = vmatpush.bf16.msra.mxu0 %v188
  %286 = vmatpush.bf16.msra.mxu0 %v184
  %287 = vmatpush.bf16.msra.mxu0 %v180
  %288 = vmatmul.bf16.gmra.mxu0 %v38
  %v289 = vpop.f32.mrf.mxu0
  %v290 = vadd.f32 %v76, %v289
  %v291 = vpop.f32.mrf.mxu0
  %292 = vdwg.mxu0
  %v293 = vmax.f32 %v251, 0.0
  %v294 = vmax.f32 %v264, 0.0
  %v295 = vmax.f32 %v277, 0.0
  %v296 = vmax.f32 %v290, 0.0
  %v297 = vpack.c.bf16 %v293, %v293
  %v298 = vpack.c.bf16 %v294, %v294
  %v299 = vpack.c.bf16 %v295, %v295
  %v300 = vpack.c.bf16 %v296, %v296
  %v301 = vld [vmem:[%s3] sm:$0xff]
  %v302 = vld [vmem:[%s3 + $0x8] sm:$0xff]
  %v303 = vld [vmem:[%s3 + $0x10] sm:$0xff]
  %v304 = vld [vmem:[%s3 + $0x18] sm:$0xff]
  %v305 = vld [vmem:[%s3 + $0x20] sm:$0xff]
  %v306 = vld [vmem:[%s3 + $0x28] sm:$0xff]
  %v307 = vld [vmem:[%s3 + $0x30] sm:$0xff]
  %v308 = vld [vmem:[%s3 + $0x38] sm:$0xff]
  %v309 = vld [vmem:[%s3 + $0x40] sm:$0xff]
  %v310 = vld [vmem:[%s3 + $0x48] sm:$0xff]
  %v311 = vld [vmem:[%s3 + $0x50] sm:$0xff]
  %v312 = vld [vmem:[%s3 + $0x58] sm:$0xff]
  %v313 = vld [vmem:[%s3 + $0x60] sm:$0xff]
  %v314 = vld [vmem:[%s3 + $0x68] sm:$0xff]
  %v315 = vld [vmem:[%s3 + $0x70] sm:$0xff]
  %v316 = vld [vmem:[%s3 + $0x78] sm:$0xff]
  %v317 = vld [vmem:[%s3 + $0x80] sm:$0xff]
  %v318 = vld [vmem:[%s3 + $0x88] sm:$0xff]
  %v319 = vld [vmem:[%s3 + $0x90] sm:$0xff]
  %v320 = vld [vmem:[%s3 + $0x98] sm:$0xff]
  %v321 = vld [vmem:[%s3 + $0xa0] sm:$0xff]
  %v322 = vld [vmem:[%s3 + $0xa8] sm:$0xff]
  %v323 = vld [vmem:[%s3 + $0xb0] sm:$0xff]
  %v324 = vld [vmem:[%s3 + $0xb8] sm:$0xff]
  %v325 = vld [vmem:[%s3 + $0xc0] sm:$0xff]
  %v326 = vld [vmem:[%s3 + $0xc8] sm:$0xff]
  %v327 = vld [vmem:[%s3 + $0xd0] sm:$0xff]
  %v328 = vld [vmem:[%s3 + $0xd8] sm:$0xff]
  %v329 = vld [vmem:[%s3 + $0xe0] sm:$0xff]
  %v330 = vld [vmem:[%s3 + $0xe8] sm:$0xff]
  %v331 = vld [vmem:[%s3 + $0xf0] sm:$0xff]
  %v332 = vld [vmem:[%s3 + $0xf8] sm:$0xff]
  %v333 = vld [vmem:[%s3 + $0x100] sm:$0xff]
  %v334 = vld [vmem:[%s3 + $0x108] sm:$0xff]
  %v335 = vld [vmem:[%s3 + $0x110] sm:$0xff]
  %v336 = vld [vmem:[%s3 + $0x118] sm:$0xff]
  %v337 = vld [vmem:[%s3 + $0x120] sm:$0xff]
  %v338 = vld [vmem:[%s3 + $0x128] sm:$0xff]
  %v339 = vld [vmem:[%s3 + $0x130] sm:$0xff]
  %v340 = vld [vmem:[%s3 + $0x138] sm:$0xff]
  %v341 = vld [vmem:[%s3 + $0x140] sm:$0xff]
  %v342 = vld [vmem:[%s3 + $0x148] sm:$0xff]
  %v343 = vld [vmem:[%s3 + $0x150] sm:$0xff]
  %v344 = vld [vmem:[%s3 + $0x158] sm:$0xff]
  %v345 = vld [vmem:[%s3 + $0x160] sm:$0xff]
  %v346 = vld [vmem:[%s3 + $0x168] sm:$0xff]
  %v347 = vld [vmem:[%s3 + $0x170] sm:$0xff]
  %v348 = vld [vmem:[%s3 + $0x178] sm:$0xff]
  %v349 = vld [vmem:[%s3 + $0x180] sm:$0xff]
  %v350 = vld [vmem:[%s3 + $0x188] sm:$0xff]
  %v351 = vld [vmem:[%s3 + $0x190] sm:$0xff]
  %v352 = vld [vmem:[%s3 + $0x198] sm:$0xff]
  %v353 = vld [vmem:[%s3 + $0x1a0] sm:$0xff]
  %v354 = vld [vmem:[%s3 + $0x1a8] sm:$0xff]
  %v355 = vld [vmem:[%s3 + $0x1b0] sm:$0xff]
  %v356 = vld [vmem:[%s3 + $0x1b8] sm:$0xff]
  %v357 = vld [vmem:[%s3 + $0x1c0] sm:$0xff]
  %v358 = vld [vmem:[%s3 + $0x1c8] sm:$0xff]
  %v359 = vld [vmem:[%s3 + $0x1d0] sm:$0xff]
  %v360 = vld [vmem:[%s3 + $0x1d8] sm:$0xff]
  %v361 = vld [vmem:[%s3 + $0x1e0] sm:$0xff]
  %v362 = vld [vmem:[%s3 + $0x1e8] sm:$0xff]
  %v363 = vld [vmem:[%s3 + $0x1f0] sm:$0xff]
  %v364 = vld [vmem:[%s3 + $0x1f8] sm:$0xff]
  %v365 = vld [vmem:[%s4] sm:$0x3]
  %v367 = vperm.slane %v365, 0
  %v368 = vperm.slane %v365, 1
  %v435 = vunpack.c.l.b16 %v301
  %v436 = vunpack.c.h.b16 %v301
  %v437 = vunpack.c.l.b16 %v302
  %v438 = vunpack.c.h.b16 %v302
  %v439 = vunpack.c.l.b16 %v303
  %v440 = vunpack.c.h.b16 %v303
  %v441 = vunpack.c.l.b16 %v304
  %v442 = vunpack.c.h.b16 %v304
  %v443 = vunpack.c.l.b16 %v305
  %v444 = vunpack.c.h.b16 %v305
  %v445 = vunpack.c.l.b16 %v306
  %v446 = vunpack.c.h.b16 %v306
  %v447 = vunpack.c.l.b16 %v307
  %v448 = vunpack.c.h.b16 %v307
  %v449 = vunpack.c.l.b16 %v308
  %v450 = vunpack.c.h.b16 %v308
  %v451 = vunpack.c.l.b16 %v309
  %v452 = vunpack.c.h.b16 %v309
  %v453 = vunpack.c.l.b16 %v310
  %v454 = vunpack.c.h.b16 %v310
  %v455 = vunpack.c.l.b16 %v311
  %v456 = vunpack.c.h.b16 %v311
  %v457 = vunpack.c.l.b16 %v312
  %v458 = vunpack.c.h.b16 %v312
  %v459 = vunpack.c.l.b16 %v313
  %v460 = vunpack.c.h.b16 %v313
  %v461 = vunpack.c.l.b16 %v314
  %v462 = vunpack.c.h.b16 %v314
  %v463 = vunpack.c.l.b16 %v315
  %v464 = vunpack.c.h.b16 %v315
  %v465 = vunpack.c.l.b16 %v316
  %v466 = vunpack.c.h.b16 %v316
  %v467 = vunpack.c.l.b16 %v317
  %v468 = vunpack.c.h.b16 %v317
  %v469 = vunpack.c.l.b16 %v318
  %v470 = vunpack.c.h.b16 %v318
  %v471 = vunpack.c.l.b16 %v319
  %v472 = vunpack.c.h.b16 %v319
  %v473 = vunpack.c.l.b16 %v320
  %v474 = vunpack.c.h.b16 %v320
  %v475 = vunpack.c.l.b16 %v321
  %v476 = vunpack.c.h.b16 %v321
  %v477 = vunpack.c.l.b16 %v322
  %v478 = vunpack.c.h.b16 %v322
  %v479 = vunpack.c.l.b16 %v323
  %v480 = vunpack.c.h.b16 %v323
  %v481 = vunpack.c.l.b16 %v324
  %v482 = vunpack.c.h.b16 %v324
  %v483 = vunpack.c.l.b16 %v325
  %v484 = vunpack.c.h.b16 %v325
  %v485 = vunpack.c.l.b16 %v326
  %v486 = vunpack.c.h.b16 %v326
  %v487 = vunpack.c.l.b16 %v327
  %v488 = vunpack.c.h.b16 %v327
  %v489 = vunpack.c.l.b16 %v328
  %v490 = vunpack.c.h.b16 %v328
  %v491 = vunpack.c.l.b16 %v329
  %v492 = vunpack.c.h.b16 %v329
  %v493 = vunpack.c.l.b16 %v330
  %v494 = vunpack.c.h.b16 %v330
  %v495 = vunpack.c.l.b16 %v331
  %v496 = vunpack.c.h.b16 %v331
  %v497 = vunpack.c.l.b16 %v332
  %v498 = vunpack.c.h.b16 %v332
  %v499 = vunpack.c.l.b16 %v333
  %v500 = vunpack.c.h.b16 %v333
  %v501 = vunpack.c.l.b16 %v334
  %v502 = vunpack.c.h.b16 %v334
  %v503 = vunpack.c.l.b16 %v335
  %v504 = vunpack.c.h.b16 %v335
  %v505 = vunpack.c.l.b16 %v336
  %v506 = vunpack.c.h.b16 %v336
  %v507 = vunpack.c.l.b16 %v337
  %v508 = vunpack.c.h.b16 %v337
  %v509 = vunpack.c.l.b16 %v338
  %v510 = vunpack.c.h.b16 %v338
  %v511 = vunpack.c.l.b16 %v339
  %v512 = vunpack.c.h.b16 %v339
  %v513 = vunpack.c.l.b16 %v340
  %v514 = vunpack.c.h.b16 %v340
  %v515 = vunpack.c.l.b16 %v341
  %v516 = vunpack.c.h.b16 %v341
  %v517 = vunpack.c.l.b16 %v342
  %v518 = vunpack.c.h.b16 %v342
  %v519 = vunpack.c.l.b16 %v343
  %v520 = vunpack.c.h.b16 %v343
  %v521 = vunpack.c.l.b16 %v344
  %v522 = vunpack.c.h.b16 %v344
  %v523 = vunpack.c.l.b16 %v345
  %v524 = vunpack.c.h.b16 %v345
  %v525 = vunpack.c.l.b16 %v346
  %v526 = vunpack.c.h.b16 %v346
  %v527 = vunpack.c.l.b16 %v347
  %v528 = vunpack.c.h.b16 %v347
  %v529 = vunpack.c.l.b16 %v348
  %v530 = vunpack.c.h.b16 %v348
  %v531 = vunpack.c.l.b16 %v349
  %v532 = vunpack.c.h.b16 %v349
  %v533 = vunpack.c.l.b16 %v350
  %v534 = vunpack.c.h.b16 %v350
  %v535 = vunpack.c.l.b16 %v351
  %v536 = vunpack.c.h.b16 %v351
  %v537 = vunpack.c.l.b16 %v352
  %v538 = vunpack.c.h.b16 %v352
  %v539 = vunpack.c.l.b16 %v353
  %v540 = vunpack.c.h.b16 %v353
  %v541 = vunpack.c.l.b16 %v354
  %v542 = vunpack.c.h.b16 %v354
  %v543 = vunpack.c.l.b16 %v355
  %v544 = vunpack.c.h.b16 %v355
  %v545 = vunpack.c.l.b16 %v356
  %v546 = vunpack.c.h.b16 %v356
  %v547 = vunpack.c.l.b16 %v357
  %v548 = vunpack.c.h.b16 %v357
  %v549 = vunpack.c.l.b16 %v358
  %v550 = vunpack.c.h.b16 %v358
  %v551 = vunpack.c.l.b16 %v359
  %v552 = vunpack.c.h.b16 %v359
  %v553 = vunpack.c.l.b16 %v360
  %v554 = vunpack.c.h.b16 %v360
  %v555 = vunpack.c.l.b16 %v361
  %v556 = vunpack.c.h.b16 %v361
  %v557 = vunpack.c.l.b16 %v362
  %v558 = vunpack.c.h.b16 %v362
  %v559 = vunpack.c.l.b16 %v363
  %v560 = vunpack.c.h.b16 %v363
  %v561 = vunpack.c.l.b16 %v364
  %v562 = vunpack.c.h.b16 %v364
  %v563 = vpack.c.b16 %v437, %v435
  %v564 = vpack.c.b16 %v438, %v436
  %v565 = vpack.c.b16 %v441, %v439
  %v566 = vpack.c.b16 %v442, %v440
  %v567 = vpack.c.b16 %v445, %v443
  %v568 = vpack.c.b16 %v446, %v444
  %v569 = vpack.c.b16 %v449, %v447
  %v570 = vpack.c.b16 %v450, %v448
  %v571 = vpack.c.b16 %v453, %v451
  %v572 = vpack.c.b16 %v454, %v452
  %v573 = vpack.c.b16 %v457, %v455
  %v574 = vpack.c.b16 %v458, %v456
  %v575 = vpack.c.b16 %v461, %v459
  %v576 = vpack.c.b16 %v462, %v460
  %v577 = vpack.c.b16 %v465, %v463
  %v578 = vpack.c.b16 %v466, %v464
  %v579 = vpack.c.b16 %v469, %v467
  %v580 = vpack.c.b16 %v470, %v468
  %v581 = vpack.c.b16 %v473, %v471
  %v582 = vpack.c.b16 %v474, %v472
  %v583 = vpack.c.b16 %v477, %v475
  %v584 = vpack.c.b16 %v478, %v476
  %v585 = vpack.c.b16 %v481, %v479
  %v586 = vpack.c.b16 %v482, %v480
  %v587 = vpack.c.b16 %v485, %v483
  %v588 = vpack.c.b16 %v486, %v484
  %v589 = vpack.c.b16 %v489, %v487
  %v590 = vpack.c.b16 %v490, %v488
  %v591 = vpack.c.b16 %v493, %v491
  %v592 = vpack.c.b16 %v494, %v492
  %v593 = vpack.c.b16 %v497, %v495
  %v594 = vpack.c.b16 %v498, %v496
  %v595 = vpack.c.b16 %v501, %v499
  %v596 = vpack.c.b16 %v502, %v500
  %v597 = vpack.c.b16 %v505, %v503
  %v598 = vpack.c.b16 %v506, %v504
  %v599 = vpack.c.b16 %v509, %v507
  %v600 = vpack.c.b16 %v510, %v508
  %v601 = vpack.c.b16 %v513, %v511
  %v602 = vpack.c.b16 %v514, %v512
  %v603 = vpack.c.b16 %v517, %v515
  %v604 = vpack.c.b16 %v518, %v516
  %v605 = vpack.c.b16 %v521, %v519
  %v606 = vpack.c.b16 %v522, %v520
  %v607 = vpack.c.b16 %v525, %v523
  %v608 = vpack.c.b16 %v526, %v524
  %v609 = vpack.c.b16 %v529, %v527
  %v610 = vpack.c.b16 %v530, %v528
  %v611 = vpack.c.b16 %v533, %v531
  %v612 = vpack.c.b16 %v534, %v532
  %v613 = vpack.c.b16 %v537, %v535
  %v614 = vpack.c.b16 %v538, %v536
  %v615 = vpack.c.b16 %v541, %v539
  %v616 = vpack.c.b16 %v542, %v540
  %v617 = vpack.c.b16 %v545, %v543
  %v618 = vpack.c.b16 %v546, %v544
  %v619 = vpack.c.b16 %v549, %v547
  %v620 = vpack.c.b16 %v550, %v548
  %v621 = vpack.c.b16 %v553, %v551
  %v622 = vpack.c.b16 %v554, %v552
  %v623 = vpack.c.b16 %v557, %v555
  %v624 = vpack.c.b16 %v558, %v556
  %v625 = vpack.c.b16 %v561, %v559
  %v626 = vpack.c.b16 %v562, %v560
  %691 = vmatpush.bf16.msra.mxu0 %v577
  %692 = vmatpush.bf16.msra.mxu0 %v575
  %693 = vmatpush.bf16.msra.mxu0 %v573
  %694 = vmatpush.bf16.msra.mxu0 %v571
  %695 = vmatpush.bf16.msra.mxu0 %v569
  %696 = vmatpush.bf16.msra.mxu0 %v567
  %697 = vmatpush.bf16.msra.mxu0 %v565
  %698 = vmatpush.bf16.msra.mxu0 %v563
  %699 = vmatmul.bf16.gmra.mxu0 %v297
  %v700 = vpop.f32.mrf.mxu0
  %v701 = vadd.f32 %v367, %v700
  %v702 = vpop.f32.mrf.mxu0
  %703 = vdwg.mxu0
  %704 = vmatpush.bf16.msra.mxu0 %v593
  %705 = vmatpush.bf16.msra.mxu0 %v591
  %706 = vmatpush.bf16.msra.mxu0 %v589
  %707 = vmatpush.bf16.msra.mxu0 %v587
  %708 = vmatpush.bf16.msra.mxu0 %v585
  %709 = vmatpush.bf16.msra.mxu0 %v583
  %710 = vmatpush.bf16.msra.mxu0 %v581
  %711 = vmatpush.bf16.msra.mxu0 %v579
  %712 = vmatmul.bf16.gmra.mxu0 %v298
  %v713 = vpop.f32.mrf.mxu0
  %v714 = vadd.f32 %v701, %v713
  %v715 = vpop.f32.mrf.mxu0
  %716 = vdwg.mxu0
  %717 = vmatpush.bf16.msra.mxu0 %v609
  %718 = vmatpush.bf16.msra.mxu0 %v607
  %719 = vmatpush.bf16.msra.mxu0 %v605
  %720 = vmatpush.bf16.msra.mxu0 %v603
  %721 = vmatpush.bf16.msra.mxu0 %v601
  %722 = vmatpush.bf16.msra.mxu0 %v599
  %723 = vmatpush.bf16.msra.mxu0 %v597
  %724 = vmatpush.bf16.msra.mxu0 %v595
  %725 = vmatmul.bf16.gmra.mxu0 %v299
  %v726 = vpop.f32.mrf.mxu0
  %v727 = vadd.f32 %v714, %v726
  %v728 = vpop.f32.mrf.mxu0
  %729 = vdwg.mxu0
  %730 = vmatpush.bf16.msra.mxu0 %v625
  %731 = vmatpush.bf16.msra.mxu0 %v623
  %732 = vmatpush.bf16.msra.mxu0 %v621
  %733 = vmatpush.bf16.msra.mxu0 %v619
  %734 = vmatpush.bf16.msra.mxu0 %v617
  %735 = vmatpush.bf16.msra.mxu0 %v615
  %736 = vmatpush.bf16.msra.mxu0 %v613
  %737 = vmatpush.bf16.msra.mxu0 %v611
  %738 = vmatmul.bf16.gmra.mxu0 %v300
  %v739 = vpop.f32.mrf.mxu0
  %v740 = vadd.f32 %v727, %v739
  %v741 = vpop.f32.mrf.mxu0
  %742 = vdwg.mxu0
  %743 = vmatpush.bf16.msra.mxu0 %v578
  %744 = vmatpush.bf16.msra.mxu0 %v576
  %745 = vmatpush.bf16.msra.mxu0 %v574
  %746 = vmatpush.bf16.msra.mxu0 %v572
  %747 = vmatpush.bf16.msra.mxu0 %v570
  %748 = vmatpush.bf16.msra.mxu0 %v568
  %749 = vmatpush.bf16.msra.mxu0 %v566
  %750 = vmatpush.bf16.msra.mxu0 %v564
  %751 = vmatmul.bf16.gmra.mxu0 %v297
  %v752 = vpop.f32.mrf.mxu0
  %v753 = vadd.f32 %v368, %v752
  %v754 = vpop.f32.mrf.mxu0
  %755 = vdwg.mxu0
  %756 = vmatpush.bf16.msra.mxu0 %v594
  %757 = vmatpush.bf16.msra.mxu0 %v592
  %758 = vmatpush.bf16.msra.mxu0 %v590
  %759 = vmatpush.bf16.msra.mxu0 %v588
  %760 = vmatpush.bf16.msra.mxu0 %v586
  %761 = vmatpush.bf16.msra.mxu0 %v584
  %762 = vmatpush.bf16.msra.mxu0 %v582
  %763 = vmatpush.bf16.msra.mxu0 %v580
  %764 = vmatmul.bf16.gmra.mxu0 %v298
  %v765 = vpop.f32.mrf.mxu0
  %v766 = vadd.f32 %v753, %v765
  %v767 = vpop.f32.mrf.mxu0
  %768 = vdwg.mxu0
  %769 = vmatpush.bf16.msra.mxu0 %v610
  %770 = vmatpush.bf16.msra.mxu0 %v608
  %771 = vmatpush.bf16.msra.mxu0 %v606
  %772 = vmatpush.bf16.msra.mxu0 %v604
  %773 = vmatpush.bf16.msra.mxu0 %v602
  %774 = vmatpush.bf16.msra.mxu0 %v600
  %775 = vmatpush.bf16.msra.mxu0 %v598
  %776 = vmatpush.bf16.msra.mxu0 %v596
  %777 = vmatmul.bf16.gmra.mxu0 %v299
  %v778 = vpop.f32.mrf.mxu0
  %v779 = vadd.f32 %v766, %v778
  %v780 = vpop.f32.mrf.mxu0
  %781 = vdwg.mxu0
  %782 = vmatpush.bf16.msra.mxu0 %v626
  %783 = vmatpush.bf16.msra.mxu0 %v624
  %784 = vmatpush.bf16.msra.mxu0 %v622
  %785 = vmatpush.bf16.msra.mxu0 %v620
  %786 = vmatpush.bf16.msra.mxu0 %v618
  %787 = vmatpush.bf16.msra.mxu0 %v616
  %788 = vmatpush.bf16.msra.mxu0 %v614
  %789 = vmatpush.bf16.msra.mxu0 %v612
  %790 = vmatmul.bf16.gmra.mxu0 %v300
  %v791 = vpop.f32.mrf.mxu0
  %v792 = vadd.f32 %v779, %v791
  %v793 = vpop.f32.mrf.mxu0
  %794 = vdwg.mxu0
  %v795 = vmax.f32 %v740, 0.0
  %v796 = vmax.f32 %v792, 0.0
  %v797 = vpack.c.bf16 %v795, %v795
  %v798 = vpack.c.bf16 %v796, %v796
  %v799 = vld [vmem:[%s5] sm:$0xf]
  %v800 = vld [vmem:[%s5 + $0x4] sm:$0xf]
  %v801 = vld [vmem:[%s5 + $0x8] sm:$0xf]
  %v802 = vld [vmem:[%s5 + $0xc] sm:$0xf]
  %v803 = vld [vmem:[%s5 + $0x10] sm:$0xf]
  %v804 = vld [vmem:[%s5 + $0x14] sm:$0xf]
  %v805 = vld [vmem:[%s5 + $0x18] sm:$0xf]
  %v806 = vld [vmem:[%s5 + $0x1c] sm:$0xf]
  %v807 = vld [vmem:[%s5 + $0x20] sm:$0xf]
  %v808 = vld [vmem:[%s5 + $0x24] sm:$0xf]
  %v809 = vld [vmem:[%s5 + $0x28] sm:$0xf]
  %v810 = vld [vmem:[%s5 + $0x2c] sm:$0xf]
  %v811 = vld [vmem:[%s5 + $0x30] sm:$0xf]
  %v812 = vld [vmem:[%s5 + $0x34] sm:$0xf]
  %v813 = vld [vmem:[%s5 + $0x38] sm:$0xf]
  %v814 = vld [vmem:[%s5 + $0x3c] sm:$0xf]
  %v815 = vld [vmem:[%s5 + $0x40] sm:$0xf]
  %v816 = vld [vmem:[%s5 + $0x44] sm:$0xf]
  %v817 = vld [vmem:[%s5 + $0x48] sm:$0xf]
  %v818 = vld [vmem:[%s5 + $0x4c] sm:$0xf]
  %v819 = vld [vmem:[%s5 + $0x50] sm:$0xf]
  %v820 = vld [vmem:[%s5 + $0x54] sm:$0xf]
  %v821 = vld [vmem:[%s5 + $0x58] sm:$0xf]
  %v822 = vld [vmem:[%s5 + $0x5c] sm:$0xf]
  %v823 = vld [vmem:[%s5 + $0x60] sm:$0xf]
  %v824 = vld [vmem:[%s5 + $0x64] sm:$0xf]
  %v825 = vld [vmem:[%s5 + $0x68] sm:$0xf]
  %v826 = vld [vmem:[%s5 + $0x6c] sm:$0xf]
  %v827 = vld [vmem:[%s5 + $0x70] sm:$0xf]
  %v828 = vld [vmem:[%s5 + $0x74] sm:$0xf]
  %v829 = vld [vmem:[%s5 + $0x78] sm:$0xf]
  %v830 = vld [vmem:[%s5 + $0x7c] sm:$0xf]
  %v831 = vld [vmem:[%s6] sm:$0x1]
  %v833 = vperm.slane %v831, 0
  %v867 = vunpack.c.l.b16 %v799
  %v868 = vunpack.c.l.b16 %v800
  %v869 = vunpack.c.l.b16 %v801
  %v870 = vunpack.c.l.b16 %v802
  %v871 = vunpack.c.l.b16 %v803
  %v872 = vunpack.c.l.b16 %v804
  %v873 = vunpack.c.l.b16 %v805
  %v874 = vunpack.c.l.b16 %v806
  %v875 = vunpack.c.l.b16 %v807
  %v876 = vunpack.c.l.b16 %v808
  %v877 = vunpack.c.l.b16 %v809
  %v878 = vunpack.c.l.b16 %v810
  %v879 = vunpack.c.l.b16 %v811
  %v880 = vunpack.c.l.b16 %v812
  %v881 = vunpack.c.l.b16 %v813
  %v882 = vunpack.c.l.b16 %v814
  %v883 = vunpack.c.l.b16 %v815
  %v884 = vunpack.c.l.b16 %v816
  %v885 = vunpack.c.l.b16 %v817
  %v886 = vunpack.c.l.b16 %v818
  %v887 = vunpack.c.l.b16 %v819
  %v888 = vunpack.c.l.b16 %v820
  %v889 = vunpack.c.l.b16 %v821
  %v890 = vunpack.c.l.b16 %v822
  %v891 = vunpack.c.l.b16 %v823
  %v892 = vunpack.c.l.b16 %v824
  %v893 = vunpack.c.l.b16 %v825
  %v894 = vunpack.c.l.b16 %v826
  %v895 = vunpack.c.l.b16 %v827
  %v896 = vunpack.c.l.b16 %v828
  %v897 = vunpack.c.l.b16 %v829
  %v898 = vunpack.c.l.b16 %v830
  %v899 = vpack.c.b16 %v868, %v867
  %v900 = vpack.c.b16 %v870, %v869
  %v901 = vpack.c.b16 %v872, %v871
  %v902 = vpack.c.b16 %v874, %v873
  %v903 = vpack.c.b16 %v876, %v875
  %v904 = vpack.c.b16 %v878, %v877
  %v905 = vpack.c.b16 %v880, %v879
  %v906 = vpack.c.b16 %v882, %v881
  %v907 = vpack.c.b16 %v884, %v883
  %v908 = vpack.c.b16 %v886, %v885
  %v909 = vpack.c.b16 %v888, %v887
  %v910 = vpack.c.b16 %v890, %v889
  %v911 = vpack.c.b16 %v892, %v891
  %v912 = vpack.c.b16 %v894, %v893
  %v913 = vpack.c.b16 %v896, %v895
  %v914 = vpack.c.b16 %v898, %v897
  %931 = vmatpush.bf16.msra.mxu0 %v906
  %932 = vmatpush.bf16.msra.mxu0 %v905
  %933 = vmatpush.bf16.msra.mxu0 %v904
  %934 = vmatpush.bf16.msra.mxu0 %v903
  %935 = vmatpush.bf16.msra.mxu0 %v902
  %936 = vmatpush.bf16.msra.mxu0 %v901
  %937 = vmatpush.bf16.msra.mxu0 %v900
  %938 = vmatpush.bf16.msra.mxu0 %v899
  %939 = vmatmul.bf16.gmra.mxu0 %v797
  %v940 = vpop.f32.mrf.mxu0
  %v941 = vadd.f32 %v833, %v940
  %v942 = vpop.f32.mrf.mxu0
  %943 = vdwg.mxu0
  %944 = vmatpush.bf16.msra.mxu0 %v914
  %945 = vmatpush.bf16.msra.mxu0 %v913
  %946 = vmatpush.bf16.msra.mxu0 %v912
  %947 = vmatpush.bf16.msra.mxu0 %v911
  %948 = vmatpush.bf16.msra.mxu0 %v910
  %949 = vmatpush.bf16.msra.mxu0 %v909
  %950 = vmatpush.bf16.msra.mxu0 %v908
  %951 = vmatpush.bf16.msra.mxu0 %v907
  %952 = vmatmul.bf16.gmra.mxu0 %v798
  %v953 = vpop.f32.mrf.mxu0
  %v954 = vadd.f32 %v941, %v953
  %v955 = vpop.f32.mrf.mxu0
  %956 = vdwg.mxu0
  %v957 = vmax.f32 %v954, 0.0
  %v958 = vpack.c.bf16 %v957, %v957
  %v959 = vld [vmem:[%s7] sm:$0xf]
  %v960 = vld [vmem:[%s7 + $0x4] sm:$0xf]
  %v961 = vld [vmem:[%s7 + $0x8] sm:$0xf]
  %v962 = vld [vmem:[%s7 + $0xc] sm:$0xf]
  %v963 = vld [vmem:[%s7 + $0x10] sm:$0xf]
  %v964 = vld [vmem:[%s7 + $0x14] sm:$0xf]
  %v965 = vld [vmem:[%s7 + $0x18] sm:$0xf]
  %v966 = vld [vmem:[%s7 + $0x1c] sm:$0xf]
  %v967 = vld [vmem:[%s7 + $0x20] sm:$0xf]
  %v968 = vld [vmem:[%s7 + $0x24] sm:$0xf]
  %v969 = vld [vmem:[%s7 + $0x28] sm:$0xf]
  %v970 = vld [vmem:[%s7 + $0x2c] sm:$0xf]
  %v971 = vld [vmem:[%s7 + $0x30] sm:$0xf]
  %v972 = vld [vmem:[%s7 + $0x34] sm:$0xf]
  %v973 = vld [vmem:[%s7 + $0x38] sm:$0xf]
  %v974 = vld [vmem:[%s7 + $0x3c] sm:$0xf]
  %v975 = vld [vmem:[%s8] sm:$0x1]
  %v977 = vperm.slane %v975, 0
  %v995 = vunpack.c.l.b16 %v959
  %v996 = vunpack.c.l.b16 %v960
  %v997 = vunpack.c.l.b16 %v961
  %v998 = vunpack.c.l.b16 %v962
  %v999 = vunpack.c.l.b16 %v963
  %v1000 = vunpack.c.l.b16 %v964
  %v1001 = vunpack.c.l.b16 %v965
  %v1002 = vunpack.c.l.b16 %v966
  %v1003 = vunpack.c.l.b16 %v967
  %v1004 = vunpack.c.l.b16 %v968
  %v1005 = vunpack.c.l.b16 %v969
  %v1006 = vunpack.c.l.b16 %v970
  %v1007 = vunpack.c.l.b16 %v971
  %v1008 = vunpack.c.l.b16 %v972
  %v1009 = vunpack.c.l.b16 %v973
  %v1010 = vunpack.c.l.b16 %v974
  %v1011 = vpack.c.b16 %v996, %v995
  %v1012 = vpack.c.b16 %v998, %v997
  %v1013 = vpack.c.b16 %v1000, %v999
  %v1014 = vpack.c.b16 %v1002, %v1001
  %v1015 = vpack.c.b16 %v1004, %v1003
  %v1016 = vpack.c.b16 %v1006, %v1005
  %v1017 = vpack.c.b16 %v1008, %v1007
  %v1018 = vpack.c.b16 %v1010, %v1009
  %1027 = vmatpush.bf16.msra.mxu0 %v1018
  %1028 = vmatpush.bf16.msra.mxu0 %v1017
  %1029 = vmatpush.bf16.msra.mxu0 %v1016
  %1030 = vmatpush.bf16.msra.mxu0 %v1015
  %1031 = vmatpush.bf16.msra.mxu0 %v1014
  %1032 = vmatpush.bf16.msra.mxu0 %v1013
  %1033 = vmatpush.bf16.msra.mxu0 %v1012
  %1034 = vmatpush.bf16.msra.mxu0 %v1011
  %1035 = vmatmul.bf16.gmra.mxu0 %v958
  %v1036 = vpop.f32.mrf.mxu0
  %v1037 = vadd.f32 %v977, %v1036
  %v1038 = vpop.f32.mrf.mxu0
  %1039 = vdwg.mxu0
  %v1040 = vmax.f32 %v1037, 0.0
  %v1041 = vpack.c.bf16 %v1040, %v1040
  %v1042 = vld [vmem:[%s9] sm:$0xf]
  %v1043 = vld [vmem:[%s9 + $0x4] sm:$0xf]
  %v1044 = vld [vmem:[%s9 + $0x8] sm:$0xf]
  %v1045 = vld [vmem:[%s9 + $0xc] sm:$0xf]
  %v1046 = vld [vmem:[%s9 + $0x10] sm:$0xf]
  %v1047 = vld [vmem:[%s9 + $0x14] sm:$0xf]
  %v1048 = vld [vmem:[%s9 + $0x18] sm:$0xf]
  %v1049 = vld [vmem:[%s9 + $0x1c] sm:$0xf]
  %v1050 = vld [vmem:[%s9 + $0x20] sm:$0xf]
  %v1051 = vld [vmem:[%s9 + $0x24] sm:$0xf]
  %v1052 = vld [vmem:[%s9 + $0x28] sm:$0xf]
  %v1053 = vld [vmem:[%s9 + $0x2c] sm:$0xf]
  %v1054 = vld [vmem:[%s9 + $0x30] sm:$0xf]
  %v1055 = vld [vmem:[%s9 + $0x34] sm:$0xf]
  %v1056 = vld [vmem:[%s9 + $0x38] sm:$0xf]
  %v1057 = vld [vmem:[%s9 + $0x3c] sm:$0xf]
  %v1058 = vld [vmem:[%s10] sm:$0x1]
  %v1060 = vperm.slane %v1058, 0
  %v1078 = vunpack.c.l.b16 %v1042
  %v1079 = vunpack.c.l.b16 %v1043
  %v1080 = vunpack.c.l.b16 %v1044
  %v1081 = vunpack.c.l.b16 %v1045
  %v1082 = vunpack.c.l.b16 %v1046
  %v1083 = vunpack.c.l.b16 %v1047
  %v1084 = vunpack.c.l.b16 %v1048
  %v1085 = vunpack.c.l.b16 %v1049
  %v1086 = vunpack.c.l.b16 %v1050
  %v1087 = vunpack.c.l.b16 %v1051
  %v1088 = vunpack.c.l.b16 %v1052
  %v1089 = vunpack.c.l.b16 %v1053
  %v1090 = vunpack.c.l.b16 %v1054
  %v1091 = vunpack.c.l.b16 %v1055
  %v1092 = vunpack.c.l.b16 %v1056
  %v1093 = vunpack.c.l.b16 %v1057
  %v1094 = vpack.c.b16 %v1079, %v1078
  %v1095 = vpack.c.b16 %v1081, %v1080
  %v1096 = vpack.c.b16 %v1083, %v1082
  %v1097 = vpack.c.b16 %v1085, %v1084
  %v1098 = vpack.c.b16 %v1087, %v1086
  %v1099 = vpack.c.b16 %v1089, %v1088
  %v1100 = vpack.c.b16 %v1091, %v1090
  %v1101 = vpack.c.b16 %v1093, %v1092
  %1110 = vmatpush.bf16.msra.mxu0 %v1101
  %1111 = vmatpush.bf16.msra.mxu0 %v1100
  %1112 = vmatpush.bf16.msra.mxu0 %v1099
  %1113 = vmatpush.bf16.msra.mxu0 %v1098
  %1114 = vmatpush.bf16.msra.mxu0 %v1097
  %1115 = vmatpush.bf16.msra.mxu0 %v1096
  %1116 = vmatpush.bf16.msra.mxu0 %v1095
  %1117 = vmatpush.bf16.msra.mxu0 %v1094
  %1118 = vmatmul.bf16.gmra.mxu0 %v1041
  %v1119 = vpop.f32.mrf.mxu0
  %v1120 = vadd.f32 %v1060, %v1119
  %v1121 = vpop.f32.mrf.mxu0
  %1122 = vdwg.mxu0
  %1123 = vst [vmem:[%s11] sm:$0xff] %v1120
  // Predicated region
  $region46: #{dqn_forward.1} parent=0 // pred_check
    _
  $region47: #{dqn_forward.1} parent=0 // pred_check_branch
    %1125 = sbr.rel (0) target = $region49
  $region48: #{dqn_forward.1} parent=0 // pred_region
    _
  $region49: #{dqn_forward.1} parent=0 // pred_fallthru
    _
  // Predicated region
  $region50: #{dqn_forward.1} parent=0 // pred_check
    _
  $region51: #{dqn_forward.1} parent=0 // pred_check_branch
    %1127 = sbr.rel (0) target = $region53
  $region52: #{dqn_forward.1} parent=0 // pred_region
    _
  $region53: #{dqn_forward.1} parent=0 // pred_fallthru
    _

</llo_original>
